<compile_context>
chip_gen: v7x
topology: tpu7x:2x2x1
jax: 0.10.0
libtpu: 0.0.40
codegen_flags: <defaults>
</compile_context>

<pallas_src>
import functools

import jax
import jax.numpy as jnp
from jax.experimental import pallas as pl
from jax.experimental.pallas import tpu as pltpu


def _scale_kernel(x_ref, o_ref, *, scale):
    # (TM, TN) VMEM tiles. One vreg multiply; HBM DMA is the binding resource,
    # so no extra in-kernel work (no upcasts, no reshapes).
    o_ref[...] = x_ref[...] * scale


def _pick_tiling(n_main: int, itemsize: int):
    """Pick a lane-dense (n_rows, TN) view and a (TM, TN) tile for a
    128-aligned element count `n_main`. Returns (n_rows, tm, tn, grid)."""
    # Largest lane-dense width (multiple of 128, <= 2048) dividing n_main.
    tn = 128
    for cand in (2048, 1024, 512, 256, 128):
        if n_main % cand == 0:
            tn = cand
            break
    n_rows = n_main // tn
    total_bytes = n_main * itemsize

    # ~4 MiB tiles: double-buffered input + output ~= 16 MiB, covered by the
    # explicit vmem_limit_bytes below on v5e/v6e/v7x alike.
    tile_bytes = 4 << 20
    rows_per_tile = max(8, (tile_bytes // (tn * itemsize)) // 8 * 8)

    # Minimum number of grid steps:
    #   >= 4 for multi-MiB tensors (pipelining + both v7x TensorCores busy),
    #   >= 2 for anything bigger than one (8, tn) slab (hide DMA latency),
    #   1 for tiny tensors.
    if total_bytes >= (2 << 20):
        min_steps = 4
    elif n_rows > 8:
        min_steps = 2
    else:
        min_steps = 1

    steps = max(min_steps, pl.cdiv(n_rows, rows_per_tile))
    if steps > 1 and steps % 2:
        steps += 1  # prefer an even grid: no straggler tile on v7x's 2 TCs
    steps = min(steps, n_rows)

    tm = max(1, pl.cdiv(n_rows, steps))
    if tm < n_rows:
        # Partial blocks must be sublane-aligned (multiple of 8); a block equal
        # to the full row extent is always legal.
        tm = min(-(-tm // 8) * 8, n_rows)
    grid = pl.cdiv(n_rows, tm)
    return n_rows, tm, tn, grid


def scale_forward(x: jax.Array, scale: float) -> jax.Array:
    """y = x * scale, computed in a Pallas TPU kernel (matches torch forward
    for floating dtypes; dtype is preserved)."""
    # TODO(synk): `scale` is baked in as a compile-time immediate since the
    # module stores it as a static Python number; pass it via SMEM / scalar
    # prefetch if it ever becomes a traced (learned / per-call) value.
    scale = float(scale)
    orig_shape = x.shape
    dtype = x.dtype
    n_elem = x.size
    itemsize = jnp.dtype(dtype).itemsize

    if n_elem == 0:
        return x

    x_flat = jnp.reshape(x, (-1,))

    # 128-aligned main region -> kernel; tiny tail (<128 elems) -> plain XLA.
    # This avoids the pad + slice round trips (extra full HBM read+write).
    n_main = (n_elem // 128) * 128
    if n_main == 0:
        # Tensor smaller than one lane row: not worth a kernel launch.
        return jnp.reshape(x_flat * scale, orig_shape)

    x_main = x_flat[:n_main]
    n_rows, tm, tn, grid = _pick_tiling(n_main, itemsize)
    x2d = jnp.reshape(x_main, (n_rows, tn))

    kernel = functools.partial(_scale_kernel, scale=scale)
    y2d = pl.pallas_call(
        kernel,
        out_shape=jax.ShapeDtypeStruct((n_rows, tn), dtype),
        grid_spec=pltpu.PrefetchScalarGridSpec(
            num_scalar_prefetch=0,
            grid=(grid,),
            in_specs=[pl.BlockSpec((tm, tn), lambda i: (i, 0))],
            out_specs=pl.BlockSpec((tm, tn), lambda i: (i, 0)),
        ),
        compiler_params=pltpu.CompilerParams(
            dimension_semantics=("parallel",),
            # 4x ~4 MiB resident tiles (double-buffered in+out) + headroom;
            # needed on v5e (16 MiB default scoped VMEM), safe on v6e/v7x.
            vmem_limit_bytes=32 * 1024 * 1024,
        ),
        cost_estimate=pl.CostEstimate(
            flops=n_main,
            transcendentals=0,
            bytes_accessed=2 * n_main * itemsize,
        ),
    )(x2d)

    y_flat = jnp.reshape(y2d, (-1,))
    if n_main != n_elem:
        tail = x_flat[n_main:] * scale
        y_flat = jnp.concatenate([y_flat, tail])
    return jnp.reshape(y_flat, orig_shape)


if __name__ == "__main__":
    key = jax.random.PRNGKey(0)
    scale = 0.5  # static module parameter: Scale(scale=0.5)

    # Primary test: small NCHW tensor consistent with typical conv inputs
    # (128-aligned size -> pure kernel path).
    x = jax.random.normal(key, (2, 4, 16, 16), dtype=jnp.float32)
    y = scale_forward(x, scale)
    y = jax.block_until_ready(y)
    ref = x * scale
    assert y.shape == x.shape and y.dtype == x.dtype
    assert jnp.allclose(y, ref, atol=1e-6, rtol=1e-6)

    # Secondary test: ragged (non-128-multiple) size -> kernel main + XLA tail.
    k2 = jax.random.PRNGKey(1)
    x2 = jax.random.normal(k2, (2, 4, 17, 17), dtype=jnp.float32)
    y2 = jax.block_until_ready(scale_forward(x2, scale))
    assert y2.shape == x2.shape and y2.dtype == x2.dtype
    assert jnp.allclose(y2, x2 * scale, atol=1e-6, rtol=1e-6)

    print("KERNEL_OK")
</pallas_src>

<mosaic_0001>
module attributes {stable_mosaic.version = 11 : i64} {
  func.func @_scale_kernel(%arg0: i32, %arg1: memref<1x2048xf32, #tpu.memory_space<vmem>>, %arg2: memref<1x2048xf32, #tpu.memory_space<vmem>>) attributes {dimension_semantics = [#tpu.dimension_semantics<parallel>], iteration_bounds = array<i64: 1>, scalar_prefetch = 0 : i64, scratch_operands = 0 : i64, tpu.core_type = #tpu.core_type<tc>, window_params = [{transform_indices = @transform_0, window_bounds = array<i64: 1, 2048>}, {transform_indices = @transform_1, window_bounds = array<i64: 1, 2048>}]} {
    %c0 = arith.constant 0 : index
    %c0_0 = arith.constant 0 : index
    %0 = vector.load %arg1[%c0, %c0_0] : memref<1x2048xf32, #tpu.memory_space<vmem>>, vector<1x2048xf32>
    %cst = arith.constant 5.000000e-01 : f32
    %1 = vector.broadcast %cst : f32 to vector<1x2048xf32>
    %2 = arith.mulf %0, %1 : vector<1x2048xf32>
    %c0_1 = arith.constant 0 : index
    %c0_2 = arith.constant 0 : index
    %3 = vector.load %arg2[%c0_1, %c0_2] : memref<1x2048xf32, #tpu.memory_space<vmem>>, vector<1x2048xf32>
    tpu.vector_store %arg2[%c0_1, %c0_2], %2 {strides = array<i32>} : memref<1x2048xf32, #tpu.memory_space<vmem>>, vector<1x2048xf32>,
    return
  }
  func.func @transform_0(%arg0: i32) -> (i32, i32) {
    %c0_i32 = arith.constant 0 : i32
    %c0_i32_0 = arith.constant 0 : i32
    return %arg0, %c0_i32 : i32, i32
  }
  func.func @transform_1(%arg0: i32) -> (i32, i32) {
    %c0_i32 = arith.constant 0 : i32
    %c0_i32_0 = arith.constant 0 : i32
    return %arg0, %c0_i32 : i32, i32
  }
}

</mosaic_0001>

<llo_original>
// kernel: tpu_custom_call.1
$region0: #{tpu_custom_call.1}
  #allocation0 [shape = 'u32[]', space=smem, size = 0x4, offset = 0x4, fixed_abs, tag = 'smem constant byte address 0x4 - core index']
  #allocation1 [shape = 'u32[144,128]{1,0:T(1,128)}', space=vmem, size = 0x12000, scoped, tag = 'internal scratch']
  %s0 = inlined_call_operand.hbm [shape: f32[1,2048], index: 0, kind: input, shape index: {}]
  %s1 = inlined_call_operand.hbm [shape: f32[1,2048], index: 1, kind: output, shape index: {}]
  %s2 = sld [smem:[#allocation0]]
  $region18: #{tpu_custom_call.1} parent=0
    _
  %s4 = ssub.s32 1, %s2
  %s5 = scalar_select 0, %s4, %s2
  $region1: #{tpu_custom_call.1} parent=0
    #allocation2 [shape = 'u8[8192]{0}', space=vmem, size = 0x2000, scoped, tag = 'input window, operand 0, single buffered']
    #allocation3 [shape = 's32[1]{0}', space=sflag, size = 0x4, scoped, tag = 'scoped memory for tpu_custom_call.1']
    #allocation4 [shape = 's32[1]{0}', space=sflag, size = 0x4, scoped, tag = 'scoped memory for tpu_custom_call.1']
    #allocation5 [shape = 'u8[8192]{0}', space=vmem, size = 0x2000, scoped, tag = 'output window, operand 0, single buffered']
    %6 = vsyncpa [#allocation3], 0
    %7 = vsyncpa [#allocation4], 0
    // Predicated region
    $region2: #{tpu_custom_call.1} parent=1 // pred_check
      _
    $region3: #{tpu_custom_call.1} parent=1 // pred_check_branch
      %9 = sbr.rel (0) target = $region5
    $region4: #{tpu_custom_call.1} parent=1 // pred_region
      %s11 = ssub.s32 256, 256
      %12 = vsyncadd [#allocation3], %s11
      %s14 = sshll.u32 [#allocation2], 4
      %s15 = int_to_ptr.vmem [resolvable:$true] %s14
      %17 = dma.hbm_to_vmem [thread:$0]  %s0, 256, %s15, [#allocation3]
    $region5: #{tpu_custom_call.1} parent=1 // pred_fallthru
      _
    // Predicated region
    $region6: #{tpu_custom_call.1} parent=1 // pred_check
      _
    $region7: #{tpu_custom_call.1} parent=1 // pred_check_branch
      %19 = sbr.rel (0) target = $region9
    $region8: #{tpu_custom_call.1} parent=1 // pred_region
      %20 = dma.done [#allocation3], 256
    $region9: #{tpu_custom_call.1} parent=1 // pred_fallthru
      _
    %v21 = vld [vmem:[#allocation2] sm:$0xff]
    %v22 = vld [vmem:[#allocation2 + $0x8] sm:$0xff]
    %v23 = vmul.f32 %v21, 0.5
    %v24 = vmul.f32 %v22, 0.5
    %25 = vst [vmem:[#allocation5] sm:$0xff] %v23
    %26 = vst [vmem:[#allocation5 + $0x8] sm:$0xff] %v24
    // Predicated region
    $region10: #{tpu_custom_call.1} parent=1 // pred_check
      _
    $region11: #{tpu_custom_call.1} parent=1 // pred_check_branch
      %28 = sbr.rel (0) target = $region13
    $region12: #{tpu_custom_call.1} parent=1 // pred_region
      %s30 = ssub.s32 256, 256
      %31 = vsyncadd [#allocation4], %s30
      %s33 = sshll.u32 [#allocation5], 4
      %s34 = int_to_ptr.vmem [resolvable:$true] %s33
      %36 = dma.vmem_to_hbm [thread:$0]  %s34, 256, %s1, [#allocation4]
    $region13: #{tpu_custom_call.1} parent=1 // pred_fallthru
      _
    // Predicated region
    $region14: #{tpu_custom_call.1} parent=1 // pred_check
      _
    $region15: #{tpu_custom_call.1} parent=1 // pred_check_branch
      %38 = sbr.rel (0) target = $region17
    $region16: #{tpu_custom_call.1} parent=1 // pred_region
      %39 = dma.done [#allocation4], 256
    $region17: #{tpu_custom_call.1} parent=1 // pred_fallthru
      _
    %40 = vsyncpa [#allocation3], 1
    %41 = vsyncpa [#allocation4], 1

</llo_original>
